<compile_context>
chip_gen: v5e
topology: v5e:2x2
jax: 0.10.0
libtpu: 0.0.40
codegen_flags: <defaults>
</compile_context>

<pallas_src>
import jax
import jax.numpy as jnp
from jax.experimental import pallas as pl
from jax.experimental.pallas import tpu as pltpu


TILE_ROWS = 256  # decoder row tile (lane axis); multiple of 128


# ----------------------------------------------------------------------------
# Encoder kernel — single invocation, feature-major layout.
#   h  = relu(W1ᵀ @ [xc|yc]ᵀ + b1)          (dh, m*nc)
#   h  = relu(W2ᵀ @ h + b2)                 (dh, m*nc)
#   r  = h @ P                              (dh, m)      deep-set mean pool
#   mu = Wmuᵀ @ r + bmu ;  raw = Wsigᵀ @ r + bsig
#   z  = mu + (0.01 + 0.99*softplus(raw)) * eps          (ns, dz, m)
# ----------------------------------------------------------------------------
def encoder_kernel(xy_ref, pool_ref, eps_ref, w1_ref, b1_ref, w2_ref, b2_ref,
                   wmu_ref, bmu_ref, wsig_ref, bsig_ref, z_ref):
    f32 = jnp.float32
    h = jnp.dot(w1_ref[...], xy_ref[...], preferred_element_type=f32) + b1_ref[...]
    h = jnp.maximum(h, 0.0).astype(jnp.bfloat16)
    h = jnp.dot(w2_ref[...], h, preferred_element_type=f32) + b2_ref[...]
    h = jnp.maximum(h, 0.0).astype(jnp.bfloat16)
    r = jnp.dot(h, pool_ref[...], preferred_element_type=f32)           # (dh, m)
    r = r.astype(jnp.bfloat16)
    mu = jnp.dot(wmu_ref[...], r, preferred_element_type=f32) + bmu_ref[...]
    raw = jnp.dot(wsig_ref[...], r, preferred_element_type=f32) + bsig_ref[...]
    sigma = 0.01 + 0.99 * jax.nn.softplus(raw)          # f32: keeps sigma > 0
    z_ref[...] = mu[None, :, :] + sigma[None, :, :] * eps_ref[...]


# ----------------------------------------------------------------------------
# Decoder kernel — one grid step per TILE_ROWS flattened (sample,batch,target)
# rows, feature-major so the row axis is the (128-dense) lane axis.
#   h    = relu(V1ᵀ @ [xt|z]ᵀ + c1)         (dh, TILE)
#   h    = relu(V2ᵀ @ h + c2)               (dh, TILE)
#   mean = V3mᵀ @ h + c3m                   (dy, TILE)   lane-dense store
#   std  = 0.01 + 0.99*softplus(V3sᵀ @ h + c3s)
# ----------------------------------------------------------------------------
def decoder_kernel(feat_ref, v1_ref, c1_ref, v2_ref, c2_ref,
                   v3m_ref, c3m_ref, v3s_ref, c3s_ref, mean_ref, std_ref):
    f32 = jnp.float32
    h = jnp.dot(v1_ref[...], feat_ref[...], preferred_element_type=f32) + c1_ref[...]
    h = jnp.maximum(h, 0.0).astype(jnp.bfloat16)
    h = jnp.dot(v2_ref[...], h, preferred_element_type=f32) + c2_ref[...]
    h = jnp.maximum(h, 0.0).astype(jnp.bfloat16)
    mean_ref[0] = jnp.dot(v3m_ref[...], h, preferred_element_type=f32) + c3m_ref[...]
    raw = jnp.dot(v3s_ref[...], h, preferred_element_type=f32) + c3s_ref[...]
    std_ref[0] = 0.01 + 0.99 * jax.nn.softplus(raw)


def run_encoder(xc, yc, eps, p):
    """Returns latent samples z of shape (ns, dz, m)."""
    m, nc, dx = xc.shape
    dy = yc.shape[-1]
    ns, dz, _ = eps.shape
    bf16 = jnp.bfloat16

    # Transposed weights; concatenated layer-1 (one dot instead of two).
    w1 = jnp.concatenate([p["w1x"], p["w1y"]], axis=0).T.astype(bf16)   # (dh, dx+dy)
    w2 = p["w2"].T.astype(bf16)                                         # (dh, dh)
    wmu = p["wz"][:, :dz].T.astype(bf16)                                # (dz, dh)
    wsig = p["wz"][:, dz:].T.astype(bf16)                               # (dz, dh)
    b1 = p["b1"].T                                                      # (dh, 1) f32
    b2 = p["b2"].T
    bmu = p["bz"][:, :dz].T                                             # (dz, 1)
    bsig = p["bz"][:, dz:].T

    # Feature-major context points: (dx+dy, m*nc) — all rows in one matmul.
    xy = jnp.concatenate([xc, yc], axis=-1).reshape(m * nc, dx + dy)
    xy_t = xy.T.astype(bf16)
    # Deep-set mean pooling as a matmul: block-diagonal (m*nc, m) of 1/nc.
    pool = (jnp.kron(jnp.eye(m, dtype=jnp.float32),
                     jnp.ones((nc, 1), jnp.float32)) / nc).astype(bf16)

    z = pl.pallas_call(
        encoder_kernel,
        out_shape=jax.ShapeDtypeStruct((ns, dz, m), jnp.float32),
    )(xy_t, pool, eps, w1, b1, w2, b2, wmu, bmu, wsig, bsig)
    return z


def run_decoder(z, xt, p, tile_rows=TILE_ROWS):
    """z: (ns, dz, m), xt: (m, nt, dx) -> mean, std each (ns, m, nt, dy)."""
    ns, dz, m = z.shape
    _, nt, dx = xt.shape
    dy = p["v3m"].shape[1]
    dfeat = dx + dz
    bf16 = jnp.bfloat16

    # Transposed weights; concatenated layer-1 over [xt | z].
    v1 = jnp.concatenate([p["v1x"], p["v1z"]], axis=0).T.astype(bf16)   # (dh, dx+dz)
    v2 = p["v2"].T.astype(bf16)
    v3m = p["v3m"].T.astype(bf16)                                       # (dy, dh)
    v3s = p["v3s"].T.astype(bf16)
    c1 = p["c1"].T
    c2 = p["c2"].T
    c3m = p["c3m"].T
    c3s = p["c3s"].T

    # Flatten (ns, m, nt) into one row axis, build [xt | z] features (XLA glue),
    # then transpose so rows sit on the lane axis (lane-dense loads/stores).
    z_smd = jnp.transpose(z, (0, 2, 1))                                 # (ns, m, dz)
    xt_b = jnp.broadcast_to(xt[None], (ns, m, nt, dx))
    z_b = jnp.broadcast_to(z_smd[:, :, None, :], (ns, m, nt, dz))
    feats = jnp.concatenate([xt_b, z_b], axis=-1).reshape(ns * m * nt, dfeat)

    rows = ns * m * nt
    num_tiles = pl.cdiv(rows, tile_rows)
    padded = num_tiles * tile_rows
    feats = jnp.pad(feats, ((0, padded - rows), (0, 0)))
    feats_t = feats.T.astype(bf16)                                      # (dfeat, padded)

    mean_t, std_t = pl.pallas_call(
        decoder_kernel,
        out_shape=(
            jax.ShapeDtypeStruct((num_tiles, dy, tile_rows), jnp.float32),
            jax.ShapeDtypeStruct((num_tiles, dy, tile_rows), jnp.float32),
        ),
        grid=(num_tiles,),
        in_specs=[
            pl.BlockSpec((dfeat, tile_rows), lambda i: (0, i)),
            pl.BlockSpec(v1.shape, lambda i: (0, 0)),
            pl.BlockSpec(c1.shape, lambda i: (0, 0)),
            pl.BlockSpec(v2.shape, lambda i: (0, 0)),
            pl.BlockSpec(c2.shape, lambda i: (0, 0)),
            pl.BlockSpec(v3m.shape, lambda i: (0, 0)),
            pl.BlockSpec(c3m.shape, lambda i: (0, 0)),
            pl.BlockSpec(v3s.shape, lambda i: (0, 0)),
            pl.BlockSpec(c3s.shape, lambda i: (0, 0)),
        ],
        out_specs=(
            pl.BlockSpec((1, dy, tile_rows), lambda i: (i, 0, 0)),
            pl.BlockSpec((1, dy, tile_rows), lambda i: (i, 0, 0)),
        ),
        compiler_params=pltpu.CompilerParams(dimension_semantics=("parallel",)),
    )(feats_t, v1, c1, v2, c2, v3m, c3m, v3s, c3s)

    # Back to (ns, m, nt, dy) — cheap wrapper-side layout plumbing.
    mean = jnp.transpose(mean_t, (0, 2, 1)).reshape(padded, dy)[:rows]
    std = jnp.transpose(std_t, (0, 2, 1)).reshape(padded, dy)[:rows]
    return mean.reshape(ns, m, nt, dy), std.reshape(ns, m, nt, dy)


def init_params(key, dx, dy, dh, dz):
    ks = jax.random.split(key, 11)

    def lin(k, fi, fo):
        return (jax.random.normal(k, (fi, fo), jnp.float32) / jnp.sqrt(fi)).astype(jnp.float32)

    return {
        # encoder
        "w1x": lin(ks[0], dx, dh), "w1y": lin(ks[1], dy, dh),
        "b1": jnp.zeros((1, dh), jnp.float32),
        "w2": lin(ks[2], dh, dh), "b2": jnp.zeros((1, dh), jnp.float32),
        "wz": lin(ks[3], dh, 2 * dz), "bz": jnp.zeros((1, 2 * dz), jnp.float32),
        # decoder
        "v1z": lin(ks[4], dz, dh), "v1x": lin(ks[5], dx, dh),
        "c1": jnp.zeros((1, dh), jnp.float32),
        "v2": lin(ks[6], dh, dh), "c2": jnp.zeros((1, dh), jnp.float32),
        "v3m": lin(ks[7], dh, dy), "c3m": jnp.zeros((1, dy), jnp.float32),
        "v3s": lin(ks[8], dh, dy), "c3s": jnp.zeros((1, dy), jnp.float32),
    }


def latent_neural_process_forward(xc, yc, xt, params, num_samples, key):
    """Returns mixture-component (mean, std) with uniform mixture log-weights
    over the sample axis (UniformMixtureLikelihood)."""
    m = xc.shape[0]
    dz = params["v1z"].shape[0]

    # Reparameterization noise (deterministic via key); sampling is fused into
    # the encoder kernel, which directly emits z of shape (ns, dz, m).
    eps = jax.random.normal(key, (num_samples, dz, m), jnp.float32)
    z = run_encoder(xc, yc, eps, params)

    # Decoder (Pallas): per-sample Normal parameters at target points.
    mean, std = run_decoder(z, xt, params)        # (num_samples, m, nt, dy) each

    # UniformMixtureLikelihood: uniform weights over the sample dimension.
    log_weights = jnp.full((num_samples,), -jnp.log(float(num_samples)), jnp.float32)
    # TODO(synk): torch.distributions.MixtureSameFamily object has no Pallas/JAX
    # equivalent here; we return its parameters instead.
    return mean, std, log_weights


if __name__ == "__main__":
    key = jax.random.PRNGKey(0)
    k_xc, k_yc, k_xt, k_par, k_eps = jax.random.split(key, 5)

    m, nc, nt, dx, dy = 2, 8, 8, 2, 1
    dh, dz, num_samples = 32, 16, 3

    xc = jax.random.normal(k_xc, (m, nc, dx), jnp.float32)
    yc = jax.random.normal(k_yc, (m, nc, dy), jnp.float32)
    xt = jax.random.normal(k_xt, (m, nt, dx), jnp.float32)

    params = init_params(k_par, dx, dy, dh, dz)

    mean, std, log_w = latent_neural_process_forward(
        xc, yc, xt, params, num_samples, k_eps)
    jax.block_until_ready((mean, std, log_w))

    assert mean.shape == (num_samples, m, nt, dy)
    assert std.shape == (num_samples, m, nt, dy)
    assert log_w.shape == (num_samples,)
    assert bool(jnp.all(std > 0.0))
    assert bool(jnp.all(jnp.isfinite(mean)))
    assert bool(jnp.all(jnp.isfinite(std)))
    print("KERNEL_OK")
</pallas_src>

<mosaic_0001>
module attributes {stable_mosaic.version = 11 : i64} {
  func.func @encoder_kernel(%arg0: memref<3x16xbf16, #tpu.memory_space<vmem>>, %arg1: memref<16x2xbf16, #tpu.memory_space<vmem>>, %arg2: memref<3x16x2xf32, #tpu.memory_space<vmem>>, %arg3: memref<32x3xbf16, #tpu.memory_space<vmem>>, %arg4: memref<32x1xf32, #tpu.memory_space<vmem>>, %arg5: memref<32x32xbf16, #tpu.memory_space<vmem>>, %arg6: memref<32x1xf32, #tpu.memory_space<vmem>>, %arg7: memref<16x32xbf16, #tpu.memory_space<vmem>>, %arg8: memref<16x1xf32, #tpu.memory_space<vmem>>, %arg9: memref<16x32xbf16, #tpu.memory_space<vmem>>, %arg10: memref<16x1xf32, #tpu.memory_space<vmem>>, %arg11: memref<3x16x2xf32, #tpu.memory_space<vmem>>) attributes {dimension_semantics = [], scalar_prefetch = 0 : i64, scratch_operands = 0 : i64, tpu.core_type = #tpu.core_type<tc>} {
    %c0 = arith.constant 0 : index
    %c0_0 = arith.constant 0 : index
    %0 = vector.load %arg3[%c0, %c0_0] : memref<32x3xbf16, #tpu.memory_space<vmem>>, vector<32x3xbf16>
    %c0_1 = arith.constant 0 : index
    %c0_2 = arith.constant 0 : index
    %1 = vector.load %arg0[%c0_1, %c0_2] : memref<3x16xbf16, #tpu.memory_space<vmem>>, vector<3x16xbf16>
    %cst = arith.constant dense<0.000000e+00> : vector<32x16xf32>
    %2 = tpu.matmul %0, %1, %cst {dimension_numbers = #tpu.dot_dimension_numbers<[1], [0], [0], [1], [0, 0, 1, 1], [], []>} : vector<32x3xbf16>, vector<3x16xbf16>, vector<32x16xf32> -> vector<32x16xf32>
    %c0_3 = arith.constant 0 : index
    %c0_4 = arith.constant 0 : index
    %3 = vector.load %arg4[%c0_3, %c0_4] : memref<32x1xf32, #tpu.memory_space<vmem>>, vector<32x1xf32>
    %4 = vector.broadcast %3 : vector<32x1xf32> to vector<32x16xf32>
    %5 = arith.addf %2, %4 : vector<32x16xf32>
    %cst_5 = arith.constant 0.000000e+00 : f32
    %6 = vector.broadcast %cst_5 : f32 to vector<32x16xf32>
    %7 = arith.maximumf %5, %6 : vector<32x16xf32>
    %8 = arith.truncf %7 : vector<32x16xf32> to vector<32x16xbf16>
    %c0_6 = arith.constant 0 : index
    %c0_7 = arith.constant 0 : index
    %9 = vector.load %arg5[%c0_6, %c0_7] : memref<32x32xbf16, #tpu.memory_space<vmem>>, vector<32x32xbf16>
    %cst_8 = arith.constant dense<0.000000e+00> : vector<32x16xf32>
    %10 = tpu.matmul %9, %8, %cst_8 {dimension_numbers = #tpu.dot_dimension_numbers<[1], [0], [0], [1], [0, 0, 1, 1], [], []>} : vector<32x32xbf16>, vector<32x16xbf16>, vector<32x16xf32> -> vector<32x16xf32>
    %c0_9 = arith.constant 0 : index
    %c0_10 = arith.constant 0 : index
    %11 = vector.load %arg6[%c0_9, %c0_10] : memref<32x1xf32, #tpu.memory_space<vmem>>, vector<32x1xf32>
    %12 = vector.broadcast %11 : vector<32x1xf32> to vector<32x16xf32>
    %13 = arith.addf %10, %12 : vector<32x16xf32>
    %cst_11 = arith.constant 0.000000e+00 : f32
    %14 = vector.broadcast %cst_11 : f32 to vector<32x16xf32>
    %15 = arith.maximumf %13, %14 : vector<32x16xf32>
    %16 = arith.truncf %15 : vector<32x16xf32> to vector<32x16xbf16>
    %c0_12 = arith.constant 0 : index
    %c0_13 = arith.constant 0 : index
    %17 = vector.load %arg1[%c0_12, %c0_13] : memref<16x2xbf16, #tpu.memory_space<vmem>>, vector<16x2xbf16>
    %cst_14 = arith.constant dense<0.000000e+00> : vector<32x2xf32>
    %18 = tpu.matmul %16, %17, %cst_14 {dimension_numbers = #tpu.dot_dimension_numbers<[1], [0], [0], [1], [0, 0, 1, 1], [], []>} : vector<32x16xbf16>, vector<16x2xbf16>, vector<32x2xf32> -> vector<32x2xf32>
    %19 = arith.truncf %18 : vector<32x2xf32> to vector<32x2xbf16>
    %c0_15 = arith.constant 0 : index
    %c0_16 = arith.constant 0 : index
    %20 = vector.load %arg7[%c0_15, %c0_16] : memref<16x32xbf16, #tpu.memory_space<vmem>>, vector<16x32xbf16>
    %cst_17 = arith.constant dense<0.000000e+00> : vector<16x2xf32>
    %21 = tpu.matmul %20, %19, %cst_17 {dimension_numbers = #tpu.dot_dimension_numbers<[1], [0], [0], [1], [0, 0, 1, 1], [], []>} : vector<16x32xbf16>, vector<32x2xbf16>, vector<16x2xf32> -> vector<16x2xf32>
    %c0_18 = arith.constant 0 : index
    %c0_19 = arith.constant 0 : index
    %22 = vector.load %arg8[%c0_18, %c0_19] : memref<16x1xf32, #tpu.memory_space<vmem>>, vector<16x1xf32>
    %23 = vector.broadcast %22 : vector<16x1xf32> to vector<16x2xf32>
    %24 = arith.addf %21, %23 : vector<16x2xf32>
    %c0_20 = arith.constant 0 : index
    %c0_21 = arith.constant 0 : index
    %25 = vector.load %arg9[%c0_20, %c0_21] : memref<16x32xbf16, #tpu.memory_space<vmem>>, vector<16x32xbf16>
    %cst_22 = arith.constant dense<0.000000e+00> : vector<16x2xf32>
    %26 = tpu.matmul %25, %19, %cst_22 {dimension_numbers = #tpu.dot_dimension_numbers<[1], [0], [0], [1], [0, 0, 1, 1], [], []>} : vector<16x32xbf16>, vector<32x2xbf16>, vector<16x2xf32> -> vector<16x2xf32>
    %c0_23 = arith.constant 0 : index
    %c0_24 = arith.constant 0 : index
    %27 = vector.load %arg10[%c0_23, %c0_24] : memref<16x1xf32, #tpu.memory_space<vmem>>, vector<16x1xf32>
    %28 = vector.broadcast %27 : vector<16x1xf32> to vector<16x2xf32>
    %29 = arith.addf %26, %28 : vector<16x2xf32>
    %cst_25 = arith.constant 0.000000e+00 : f32
    %30 = vector.broadcast %cst_25 : f32 to vector<16x2xf32>
    %31 = arith.maximumf %29, %30 : vector<16x2xf32>
    %32 = vector.broadcast %cst_25 : f32 to vector<16x2xf32>
    %33 = arith.subf %29, %32 : vector<16x2xf32>
    %34 = arith.cmpf one, %33, %33 : vector<16x2xf32>
    %35 = vector.broadcast %cst_25 : f32 to vector<16x2xf32>
    %36 = arith.addf %29, %35 : vector<16x2xf32>
    %37 = math.absf %33 : vector<16x2xf32>
    %cst_26 = arith.constant 0.000000e+00 : f32
    %38 = vector.broadcast %cst_26 : f32 to vector<16x2xf32>
    %39 = arith.subf %38, %37 : vector<16x2xf32>
    %40 = math.exp %39 : vector<16x2xf32>
    %41 = math.log1p %40 : vector<16x2xf32>
    %42 = arith.addf %31, %41 : vector<16x2xf32>
    %43 = arith.select %34, %36, %42 : vector<16x2xi1>, vector<16x2xf32>
    %cst_27 = arith.constant 9.900000e-01 : f32
    %44 = vector.broadcast %cst_27 : f32 to vector<16x2xf32>
    %45 = arith.mulf %44, %43 : vector<16x2xf32>
    %cst_28 = arith.constant 0.00999999977 : f32
    %46 = vector.broadcast %cst_28 : f32 to vector<16x2xf32>
    %47 = arith.addf %46, %45 : vector<16x2xf32>
    %48 = vector.shape_cast %24 : vector<16x2xf32> to vector<1x16x2xf32>
    %49 = vector.shape_cast %47 : vector<16x2xf32> to vector<1x16x2xf32>
    %c0_29 = arith.constant 0 : index
    %c0_30 = arith.constant 0 : index
    %c0_31 = arith.constant 0 : index
    %50 = vector.load %arg2[%c0_29, %c0_30, %c0_31] : memref<3x16x2xf32, #tpu.memory_space<vmem>>, vector<3x16x2xf32>
    %51 = vector.broadcast %49 : vector<1x16x2xf32> to vector<3x16x2xf32>
    %52 = arith.mulf %51, %50 : vector<3x16x2xf32>
    %53 = vector.broadcast %48 : vector<1x16x2xf32> to vector<3x16x2xf32>
    %54 = arith.addf %53, %52 : vector<3x16x2xf32>
    %c0_32 = arith.constant 0 : index
    %c0_33 = arith.constant 0 : index
    %c0_34 = arith.constant 0 : index
    %55 = vector.load %arg11[%c0_32, %c0_33, %c0_34] : memref<3x16x2xf32, #tpu.memory_space<vmem>>, vector<3x16x2xf32>
    tpu.vector_store %arg11[%c0_32, %c0_33, %c0_34], %54 {strides = array<i32>} : memref<3x16x2xf32, #tpu.memory_space<vmem>>, vector<3x16x2xf32>,
    return
  }
}

</mosaic_0001>

<llo_original>
// kernel: tpu_custom_call.1
$region0: #{tpu_custom_call.1}
  #allocation0 [shape = 'u32[]', space=smem, size = 0x4, offset = 0x4, fixed_abs, tag = 'smem constant byte address 0x4 - core index']
  #allocation1 [shape = 'u32[72,128]{1,0:T(1,128)}', space=vmem, size = 0x9000, scoped, tag = 'internal scratch']
  %s0 = inlined_call_operand.vmem [shape: bf16[3,16], index: 0, kind: input, shape index: {}]
  %s1 = inlined_call_operand.vmem [shape: bf16[16,2], index: 1, kind: input, shape index: {}]
  %s2 = inlined_call_operand.vmem [shape: f32[3,16,2], index: 2, kind: input, shape index: {}]
  %s3 = inlined_call_operand.vmem [shape: bf16[32,3], index: 3, kind: input, shape index: {}]
  %s4 = inlined_call_operand.vmem [shape: f32[32,1], index: 4, kind: input, shape index: {}]
  %s5 = inlined_call_operand.vmem [shape: bf16[32,32], index: 5, kind: input, shape index: {}]
  %s6 = inlined_call_operand.vmem [shape: f32[32,1], index: 6, kind: input, shape index: {}]
  %s7 = inlined_call_operand.vmem [shape: bf16[16,32], index: 7, kind: input, shape index: {}]
  %s8 = inlined_call_operand.vmem [shape: f32[16,1], index: 8, kind: input, shape index: {}]
  %s9 = inlined_call_operand.vmem [shape: bf16[16,32], index: 9, kind: input, shape index: {}]
  %s10 = inlined_call_operand.vmem [shape: f32[16,1], index: 10, kind: input, shape index: {}]
  %s11 = inlined_call_operand.vmem [shape: f32[3,16,2], index: 11, kind: output, shape index: {}]
  %s12 = sld [smem:[#allocation0]]
  $region54: #{tpu_custom_call.1} parent=0
    _
  %s14 = ssub.s32 1, %s12
  %s15 = scalar_select 0, %s14, %s12
  // Predicated region
  $region2: #{tpu_custom_call.1} parent=0 // pred_check
    _
  $region3: #{tpu_custom_call.1} parent=0 // pred_check_branch
    %17 = sbr.rel (0) target = $region5
  $region4: #{tpu_custom_call.1} parent=0 // pred_region
    _
  $region5: #{tpu_custom_call.1} parent=0 // pred_fallthru
    _
  // Predicated region
  $region6: #{tpu_custom_call.1} parent=0 // pred_check
    _
  $region7: #{tpu_custom_call.1} parent=0 // pred_check_branch
    %19 = sbr.rel (0) target = $region9
  $region8: #{tpu_custom_call.1} parent=0 // pred_region
    _
  $region9: #{tpu_custom_call.1} parent=0 // pred_fallthru
    _
  // Predicated region
  $region10: #{tpu_custom_call.1} parent=0 // pred_check
    _
  $region11: #{tpu_custom_call.1} parent=0 // pred_check_branch
    %21 = sbr.rel (0) target = $region13
  $region12: #{tpu_custom_call.1} parent=0 // pred_region
    _
  $region13: #{tpu_custom_call.1} parent=0 // pred_fallthru
    _
  // Predicated region
  $region14: #{tpu_custom_call.1} parent=0 // pred_check
    _
  $region15: #{tpu_custom_call.1} parent=0 // pred_check_branch
    %23 = sbr.rel (0) target = $region17
  $region16: #{tpu_custom_call.1} parent=0 // pred_region
    _
  $region17: #{tpu_custom_call.1} parent=0 // pred_fallthru
    _
  // Predicated region
  $region18: #{tpu_custom_call.1} parent=0 // pred_check
    _
  $region19: #{tpu_custom_call.1} parent=0 // pred_check_branch
    %25 = sbr.rel (0) target = $region21
  $region20: #{tpu_custom_call.1} parent=0 // pred_region
    _
  $region21: #{tpu_custom_call.1} parent=0 // pred_fallthru
    _
  // Predicated region
  $region22: #{tpu_custom_call.1} parent=0 // pred_check
    _
  $region23: #{tpu_custom_call.1} parent=0 // pred_check_branch
    %27 = sbr.rel (0) target = $region25
  $region24: #{tpu_custom_call.1} parent=0 // pred_region
    _
  $region25: #{tpu_custom_call.1} parent=0 // pred_fallthru
    _
  // Predicated region
  $region26: #{tpu_custom_call.1} parent=0 // pred_check
    _
  $region27: #{tpu_custom_call.1} parent=0 // pred_check_branch
    %29 = sbr.rel (0) target = $region29
  $region28: #{tpu_custom_call.1} parent=0 // pred_region
    _
  $region29: #{tpu_custom_call.1} parent=0 // pred_fallthru
    _
  // Predicated region
  $region30: #{tpu_custom_call.1} parent=0 // pred_check
    _
  $region31: #{tpu_custom_call.1} parent=0 // pred_check_branch
    %31 = sbr.rel (0) target = $region33
  $region32: #{tpu_custom_call.1} parent=0 // pred_region
    _
  $region33: #{tpu_custom_call.1} parent=0 // pred_fallthru
    _
  // Predicated region
  $region34: #{tpu_custom_call.1} parent=0 // pred_check
    _
  $region35: #{tpu_custom_call.1} parent=0 // pred_check_branch
    %33 = sbr.rel (0) target = $region37
  $region36: #{tpu_custom_call.1} parent=0 // pred_region
    _
  $region37: #{tpu_custom_call.1} parent=0 // pred_fallthru
    _
  // Predicated region
  $region38: #{tpu_custom_call.1} parent=0 // pred_check
    _
  $region39: #{tpu_custom_call.1} parent=0 // pred_check_branch
    %35 = sbr.rel (0) target = $region41
  $region40: #{tpu_custom_call.1} parent=0 // pred_region
    _
  $region41: #{tpu_custom_call.1} parent=0 // pred_fallthru
    _
  // Predicated region
  $region42: #{tpu_custom_call.1} parent=0 // pred_check
    _
  $region43: #{tpu_custom_call.1} parent=0 // pred_check_branch
    %37 = sbr.rel (0) target = $region45
  $region44: #{tpu_custom_call.1} parent=0 // pred_region
    _
  $region45: #{tpu_custom_call.1} parent=0 // pred_fallthru
    _
  %v39 = vld [vmem:[%s3] sm:$0xf]
  %v40 = vld [vmem:[%s3 + $0x4] sm:$0xf]
  %v41 = vld [vmem:[%s3 + $0x8] sm:$0xf]
  %v42 = vld [vmem:[%s3 + $0xc] sm:$0xf]
  %v43 = vld [vmem:[%s0] sm:$0x3]
  %v44 = vld [vmem:[%s4] sm:$0xff]
  %v45 = vld [vmem:[%s4 + $0x8] sm:$0xff]
  %v46 = vld [vmem:[%s4 + $0x10] sm:$0xff]
  %v47 = vld [vmem:[%s4 + $0x18] sm:$0xff]
  %49 = vset.pattern.permute.xlu0 0
  %50 = vperm.xlu0 %49, %v44
  %v51 = vpop.permute.xlu0 %50
  %54 = vset.pattern.permute.xlu0 0
  %55 = vperm.xlu0 %54, %v45
  %v56 = vpop.permute.xlu0 %55
  %59 = vset.pattern.permute.xlu0 0
  %60 = vperm.xlu0 %59, %v46
  %v61 = vpop.permute.xlu0 %60
  %64 = vset.pattern.permute.xlu0 0
  %65 = vperm.xlu0 %64, %v47
  %v66 = vpop.permute.xlu0 %65
  %v72 = vunpack.c.l.b16 %v39
  %v73 = vunpack.c.l.b16 %v40
  %v74 = vunpack.c.l.b16 %v41
  %v75 = vunpack.c.l.b16 %v42
  %v76 = vpack.c.b16 %v73, %v72
  %v77 = vpack.c.b16 %v75, %v74
  %vm78 = vcmask 23552
  %v80 = vsel %vm78, %v76, 0
  %v83 = vsel %vm78, %v77, 0
  %vm85 = vcmask 1040384
  %vm86 = vcmask 1041408
  %v87 = vsel %vm85, 4294967295, 65535
  %v88 = vsel %vm86, %v87, 0
  %v90 = vand.u32 %v43, %v88
  %92 = vmatpush.bf16.msra.mxu0 0
  %93 = vmatpush.bf16.msra.mxu0 0
  %94 = vmatpush.bf16.msra.mxu0 0
  %95 = vmatpush.bf16.msra.mxu0 0
  %96 = vmatpush.bf16.msra.mxu0 0
  %97 = vmatpush.bf16.msra.mxu0 0
  %98 = vmatpush.bf16.msra.mxu0 0
  %99 = vmatpush.bf16.msra.mxu0 %v90
  %100 = vmatmul.bf16.gmra.mxu0 %v80
  %v101 = vpop.f32.mrf.mxu0
  %v102 = vadd.f32 %v51, %v101
  %v103 = vpop.f32.mrf.mxu0
  %v104 = vadd.f32 %v56, %v103
  %105 = vmatmul.bf16.gmra.mxu0 %v83
  %v106 = vpop.f32.mrf.mxu0
  %v107 = vadd.f32 %v61, %v106
  %v108 = vpop.f32.mrf.mxu0
  %v109 = vadd.f32 %v66, %v108
  %110 = vdwg.mxu0
  %v111 = vmax.f32 %v102, 0.0
  %v112 = vmax.f32 %v104, 0.0
  %v113 = vmax.f32 %v107, 0.0
  %v114 = vmax.f32 %v109, 0.0
  %v115 = vpack.c.bf16 %v112, %v111
  %v116 = vpack.c.bf16 %v114, %v113
  %v117 = vld [vmem:[%s5] sm:$0xf]
  %v118 = vld [vmem:[%s5 + $0x4] sm:$0xf]
  %v119 = vld [vmem:[%s5 + $0x8] sm:$0xf]
  %v120 = vld [vmem:[%s5 + $0xc] sm:$0xf]
  %v121 = vld [vmem:[%s6] sm:$0xff]
  %v122 = vld [vmem:[%s6 + $0x8] sm:$0xff]
  %v123 = vld [vmem:[%s6 + $0x10] sm:$0xff]
  %v124 = vld [vmem:[%s6 + $0x18] sm:$0xff]
  %126 = vset.pattern.permute.xlu0 0
  %127 = vperm.xlu0 %126, %v121
  %v128 = vpop.permute.xlu0 %127
  %131 = vset.pattern.permute.xlu0 0
  %132 = vperm.xlu0 %131, %v122
  %v133 = vpop.permute.xlu0 %132
  %136 = vset.pattern.permute.xlu0 0
  %137 = vperm.xlu0 %136, %v123
  %v138 = vpop.permute.xlu0 %137
  %141 = vset.pattern.permute.xlu0 0
  %142 = vperm.xlu0 %141, %v124
  %v143 = vpop.permute.xlu0 %142
  %v149 = vunpack.c.l.b16 %v117
  %v150 = vunpack.c.l.b16 %v118
  %v151 = vunpack.c.l.b16 %v119
  %v152 = vunpack.c.l.b16 %v120
  %v153 = vpack.c.b16 %v150, %v149
  %v154 = vpack.c.b16 %v152, %v151
  %vm155 = vcmask 261120
  %v157 = vsel %vm155, %v153, 0
  %v160 = vsel %vm155, %v154, 0
  %162 = vmatpush.bf16.msra.mxu0 0
  %163 = vmatpush.bf16.msra.mxu0 0
  %164 = vmatpush.bf16.msra.mxu0 0
  %165 = vmatpush.bf16.msra.mxu0 0
  %166 = vmatpush.bf16.msra.mxu0 0
  %167 = vmatpush.bf16.msra.mxu0 0
  %168 = vmatpush.bf16.msra.mxu0 %v116
  %169 = vmatpush.bf16.msra.mxu0 %v115
  %170 = vmatmul.bf16.gmra.mxu0 %v157
  %v171 = vpop.f32.mrf.mxu0
  %v172 = vadd.f32 %v128, %v171
  %v173 = vpop.f32.mrf.mxu0
  %v174 = vadd.f32 %v133, %v173
  %175 = vmatmul.bf16.gmra.mxu0 %v160
  %v176 = vpop.f32.mrf.mxu0
  %v177 = vadd.f32 %v138, %v176
  %v178 = vpop.f32.mrf.mxu0
  %v179 = vadd.f32 %v143, %v178
  %180 = vdwg.mxu0
  %v181 = vmax.f32 %v172, 0.0
  %v182 = vmax.f32 %v174, 0.0
  %v183 = vmax.f32 %v177, 0.0
  %v184 = vmax.f32 %v179, 0.0
  %v185 = vpack.c.bf16 %v182, %v181
  %v186 = vpack.c.bf16 %v184, %v183
  %v187 = vld [vmem:[%s1] sm:$0xf]
  %v188 = vld [vmem:[%s1 + $0x4] sm:$0xf]
  %v191 = vunpack.c.l.b16 %v187
  %v192 = vunpack.c.l.b16 %v188
  %v193 = vpack.c.b16 %v192, %v191
  %vm195 = vcmask 130048
  %v197 = vsel %vm195, %v185, 0
  %v200 = vsel %vm195, %v186, 0
  %202 = vmatpush.bf16.msra.mxu0 0
  %203 = vmatpush.bf16.msra.mxu0 0
  %204 = vmatpush.bf16.msra.mxu0 0
  %205 = vmatpush.bf16.msra.mxu0 0
  %206 = vmatpush.bf16.msra.mxu0 0
  %207 = vmatpush.bf16.msra.mxu0 0
  %208 = vmatpush.bf16.msra.mxu0 0
  %209 = vmatpush.bf16.msra.mxu0 %v193
  %210 = vmatmul.bf16.gmra.mxu0 %v197
  %v211 = vpop.f32.mrf.mxu0
  %v212 = vadd.f32 0.0, %v211
  %v213 = vpop.f32.mrf.mxu0
  %v214 = vadd.f32 0.0, %v213
  %215 = vmatmul.bf16.gmra.mxu0 %v200
  %v216 = vpop.f32.mrf.mxu0
  %v217 = vadd.f32 0.0, %v216
  %v218 = vpop.f32.mrf.mxu0
  %v219 = vadd.f32 0.0, %v218
  %220 = vdwg.mxu0
  %v221 = vpack.c.bf16 %v214, %v212
  %v222 = vpack.c.bf16 %v219, %v217
  %v223 = vld [vmem:[%s7] sm:$0xf]
  %v224 = vld [vmem:[%s7 + $0x4] sm:$0xf]
  %v225 = vld [vmem:[%s8] sm:$0xff]
  %v226 = vld [vmem:[%s8 + $0x8] sm:$0xff]
  %228 = vset.pattern.permute.xlu0 0
  %229 = vperm.xlu0 %228, %v225
  %v230 = vpop.permute.xlu0 %229
  %233 = vset.pattern.permute.xlu0 0
  %234 = vperm.xlu0 %233, %v226
  %v235 = vpop.permute.xlu0 %234
  %v239 = vunpack.c.l.b16 %v223
  %v240 = vunpack.c.l.b16 %v224
  %v241 = vpack.c.b16 %v240, %v239
  %v243 = vsel %vm155, %v241, 0
  %245 = vmatpush.bf16.msra.mxu0 0
  %246 = vmatpush.bf16.msra.mxu0 0
  %247 = vmatpush.bf16.msra.mxu0 0
  %248 = vmatpush.bf16.msra.mxu0 0
  %249 = vmatpush.bf16.msra.mxu0 0
  %250 = vmatpush.bf16.msra.mxu0 0
  %251 = vmatpush.bf16.msra.mxu0 %v222
  %252 = vmatpush.bf16.msra.mxu0 %v221
  %253 = vmatmul.bf16.gmra.mxu0 %v243
  %v254 = vpop.f32.mrf.mxu0
  %v255 = vadd.f32 %v230, %v254
  %v256 = vpop.f32.mrf.mxu0
  %v257 = vadd.f32 %v235, %v256
  %258 = vdwg.mxu0
  %v259 = vld [vmem:[%s9] sm:$0xf]
  %v260 = vld [vmem:[%s9 + $0x4] sm:$0xf]
  %v261 = vld [vmem:[%s10] sm:$0xff]
  %v262 = vld [vmem:[%s10 + $0x8] sm:$0xff]
  %264 = vset.pattern.permute.xlu0 0
  %265 = vperm.xlu0 %264, %v261
  %v266 = vpop.permute.xlu0 %265
  %269 = vset.pattern.permute.xlu0 0
  %270 = vperm.xlu0 %269, %v262
  %v271 = vpop.permute.xlu0 %270
  %v275 = vunpack.c.l.b16 %v259
  %v276 = vunpack.c.l.b16 %v260
  %v277 = vpack.c.b16 %v276, %v275
  %v279 = vsel %vm155, %v277, 0
  %281 = vmatpush.bf16.msra.mxu0 0
  %282 = vmatpush.bf16.msra.mxu0 0
  %283 = vmatpush.bf16.msra.mxu0 0
  %284 = vmatpush.bf16.msra.mxu0 0
  %285 = vmatpush.bf16.msra.mxu0 0
  %286 = vmatpush.bf16.msra.mxu0 0
  %287 = vmatpush.bf16.msra.mxu0 %v222
  %288 = vmatpush.bf16.msra.mxu0 %v221
  %289 = vmatmul.bf16.gmra.mxu0 %v279
  %v290 = vpop.f32.mrf.mxu0
  %v291 = vadd.f32 %v266, %v290
  %v292 = vpop.f32.mrf.mxu0
  %v293 = vadd.f32 %v271, %v292
  %294 = vdwg.mxu0
  %v295 = vmax.f32 %v291, 0.0
  %v296 = vmax.f32 %v293, 0.0
  %vm297 = vcmp.ne.f32.partialorder %v291, %v291
  %vm298 = vcmp.ne.f32.partialorder %v293, %v293
  %v299 = vadd.f32 %v291, 0.0
  %v300 = vadd.f32 %v293, 0.0
  %v301 = vand.u32 2147483647, %v291
  %v302 = vand.u32 2147483647, %v293
  %v303 = vsub.f32 0.0, %v301
  %v304 = vsub.f32 0.0, %v302
  %v305 = vmul.f32 %v303, 1.442695
  %v306 = vpow.pop %v305
  %v307 = vmul.f32 %v304, 1.442695
  %v308 = vpow.pop %v307
  %v309 = vadd.f32 %v306, 1.0
  %v310 = vlog2.pop %v309
  %v311 = vmul.f32 %v310, 0.6931472
  %v312 = vmul.f32 -0.5, %v306
  %v313 = vadd.f32 %v312, 1.0
  %v314 = vmul.f32 %v313, %v306
  %v315 = vand.u32 2147483647, %v306
  %vm316 = vcmp.lt.f32.partialorder %v315, 0.0004427343
  %v317 = vsel %vm316, %v314, %v311
  %v318 = vadd.f32 %v308, 1.0
  %v319 = vlog2.pop %v318
  %v320 = vmul.f32 %v319, 0.6931472
  %v321 = vmul.f32 -0.5, %v308
  %v322 = vadd.f32 %v321, 1.0
  %v323 = vmul.f32 %v322, %v308
  %v324 = vand.u32 2147483647, %v308
  %vm325 = vcmp.lt.f32.partialorder %v324, 0.0004427343
  %v326 = vsel %vm325, %v323, %v320
  %v327 = vadd.f32 %v295, %v317
  %v328 = vadd.f32 %v296, %v326
  %v329 = vsel %vm297, %v299, %v327
  %v330 = vsel %vm298, %v300, %v328
  %v331 = vmul.f32 %v329, 0.99
  %v332 = vmul.f32 %v330, 0.99
  %v333 = vadd.f32 %v331, 0.01
  %v334 = vadd.f32 %v332, 0.01
  %v335 = vld [vmem:[%s2] sm:$0xff]
  %v336 = vld [vmem:[%s2 + $0x8] sm:$0xff]
  %v337 = vld [vmem:[%s2 + $0x10] sm:$0xff]
  %v338 = vld [vmem:[%s2 + $0x18] sm:$0xff]
  %v339 = vld [vmem:[%s2 + $0x20] sm:$0xff]
  %v340 = vld [vmem:[%s2 + $0x28] sm:$0xff]
  %v341 = vmul.f32 %v333, %v335
  %v342 = vmul.f32 %v334, %v336
  %v343 = vmul.f32 %v333, %v337
  %v344 = vmul.f32 %v334, %v338
  %v345 = vmul.f32 %v333, %v339
  %v346 = vmul.f32 %v334, %v340
  %v347 = vadd.f32 %v255, %v341
  %v348 = vadd.f32 %v257, %v342
  %v349 = vadd.f32 %v255, %v343
  %v350 = vadd.f32 %v257, %v344
  %v351 = vadd.f32 %v255, %v345
  %v352 = vadd.f32 %v257, %v346
  %vm353 = vcmask 15360
  %354 = vst.msk [vmem:[%s11] sm:$0xff] %vm353, %v347
  %355 = vst.msk [vmem:[%s11 + $0x8] sm:$0xff] %vm353, %v348
  %356 = vst.msk [vmem:[%s11 + $0x10] sm:$0xff] %vm353, %v349
  %357 = vst.msk [vmem:[%s11 + $0x18] sm:$0xff] %vm353, %v350
  %358 = vst.msk [vmem:[%s11 + $0x20] sm:$0xff] %vm353, %v351
  %359 = vst.msk [vmem:[%s11 + $0x28] sm:$0xff] %vm353, %v352
  // Predicated region
  $region46: #{tpu_custom_call.1} parent=0 // pred_check
    _
  $region47: #{tpu_custom_call.1} parent=0 // pred_check_branch
    %361 = sbr.rel (0) target = $region49
  $region48: #{tpu_custom_call.1} parent=0 // pred_region
    _
  $region49: #{tpu_custom_call.1} parent=0 // pred_fallthru
    _
  // Predicated region
  $region50: #{tpu_custom_call.1} parent=0 // pred_check
    _
  $region51: #{tpu_custom_call.1} parent=0 // pred_check_branch
    %363 = sbr.rel (0) target = $region53
  $region52: #{tpu_custom_call.1} parent=0 // pred_region
    _
  $region53: #{tpu_custom_call.1} parent=0 // pred_fallthru
    _

</llo_original>
